<compile_context>
chip_gen: v5e
topology: v5e:2x2
jax: 0.10.0
libtpu: 0.0.40
codegen_flags: <defaults>
</compile_context>

<pallas_src>
import functools

import numpy as np
import jax
import jax.numpy as jnp
from jax import lax
from jax.experimental import pallas as pl
from jax.experimental.pallas import tpu as pltpu

_INT32_MIN = -(2 ** 31)


def _kwinner_kernel(x_ref, boost_ref, out_ref, key_ref, *, k):
    # x_ref:     VMEM (Bt, U) f32   -- Bt flattened samples
    # boost_ref: VMEM (1, U)  f32   -- pre-tiled per-unit boost term
    # out_ref:   VMEM (Bt, U) f32
    # key_ref:   VMEM (Bt, U) int32 -- order-preserving keys of boosted values
    boosted = x_ref[...] * boost_ref[...]

    # Order-preserving f32 -> int32 key (signed compare preserves float order).
    bits = pltpu.bitcast(boosted, jnp.int32)
    key_ref[...] = jnp.where(bits < 0, bits ^ jnp.int32(0x7FFFFFFF), bits)
    # NOTE: NaNs get a well-defined (extreme) ordering here, which may differ
    # from lax.top_k's NaN behavior; finite data is exact.

    # Sign pre-step: decide whether the k-th largest key is >= 0.
    cnt0 = jnp.sum((key_ref[...] >= 0).astype(jnp.int32),
                   axis=-1, keepdims=True)                      # (Bt, 1)
    prefix0 = jnp.where(cnt0 >= k, jnp.int32(0), jnp.int32(_INT32_MIN))

    # Bit-by-bit binary select of the k-th largest key (exact, 31 passes).
    def body(_, carry):
        prefix, bitval = carry
        cand = prefix + bitval                                  # (Bt, 1)
        cnt = jnp.sum((key_ref[...] >= cand).astype(jnp.int32),
                      axis=-1, keepdims=True)                   # (Bt, 1)
        prefix = jnp.where(cnt >= k, cand, prefix)
        return prefix, jnp.right_shift(bitval, 1)

    kth, _ = lax.fori_loop(0, 31, body, (prefix0, jnp.int32(1 << 30)))

    keep = key_ref[...] >= kth                                  # ties kept (>=)
    out_ref[...] = jnp.where(keep, x_ref[...],
                             jnp.float32(0.0)).astype(out_ref.dtype)


def _choose_block_b(B, units):
    """Largest batch-block that divides B, respects the sublane rule and a
    conservative VMEM budget (safe for v7x's smaller VMEM)."""
    budget = 12 * 1024 * 1024
    # f32 input (double-buffered) + f32 output (double-buffered) + i32 key scratch
    per_sample = 4 * units * 5
    cap = max(1, budget // per_sample)
    if B <= cap:
        return B
    for bt in range(cap, 0, -1):
        if B % bt == 0 and (bt % 8 == 0 or bt == B):
            return bt
    for bt in range(cap, 0, -1):
        if B % bt == 0:
            return bt
    return B


def kwinner_forward(x, duty_cycle, *, k, boost=True, beta=1.0,
                    k_inference_factor=1.0):
    """Inference-mode forward of the KWinner module.

    Returns (output, boost_term)."""
    orig_dtype = x.dtype
    B = x.shape[0]
    C = x.shape[-1]
    units = int(np.prod(x.shape[1:]))
    k_eff = int(k * k_inference_factor)

    target_duty = jnp.float32(k / units)
    if boost:
        boost_term = jnp.exp(
            beta * (target_duty - duty_cycle.astype(jnp.float32))
        ).astype(jnp.float32)
    else:
        boost_term = jnp.ones((C,), jnp.float32)

    if units <= k_eff:
        return jax.nn.relu(x), boost_term

    S = units // C
    # Lane-dense flattened view; compute in f32, cast back at the end.
    x2 = x.reshape(B, units).astype(jnp.float32)
    boost_flat = jnp.tile(boost_term, S).reshape(1, units)

    bt = _choose_block_b(B, units)
    grid = (B // bt,)

    kernel = functools.partial(_kwinner_kernel, k=k_eff)

    out = pl.pallas_call(
        kernel,
        out_shape=jax.ShapeDtypeStruct((B, units), jnp.float32),
        grid_spec=pltpu.PrefetchScalarGridSpec(
            num_scalar_prefetch=0,
            grid=grid,
            in_specs=[
                pl.BlockSpec((bt, units), lambda b: (b, 0)),
                pl.BlockSpec((1, units), lambda b: (0, 0)),
            ],
            out_specs=pl.BlockSpec((bt, units), lambda b: (b, 0)),
            scratch_shapes=[pltpu.VMEM((bt, units), jnp.int32)],
        ),
        compiler_params=pltpu.CompilerParams(
            dimension_semantics=("parallel",)),
    )(x2, boost_flat)

    return out.reshape(x.shape).astype(orig_dtype), boost_term


def kwinner_reference(x, boost_term, k_eff):
    B = x.shape[0]
    flat_x = x.reshape(B, -1)
    flat_b = (x * boost_term).reshape(B, -1)
    kth = lax.top_k(flat_b, k_eff)[0][:, -1]
    mask = flat_b >= kth[:, None]
    return jnp.where(mask, flat_x, 0.0).reshape(x.shape)


if __name__ == "__main__":
    key = jax.random.PRNGKey(0)
    B, H, W, C = 2, 8, 8, 16          # units = 1024 (lane-dense, multiple of 128)
    K = 64

    x = jax.random.normal(key, (B, H, W, C), dtype=jnp.float32)
    # duty_cycle buffer has shape (filters,) = (C,); the module initializes it
    # to zeros — use a deterministic non-trivial value to exercise the
    # per-filter boost broadcast (simulates a partially-trained state).
    duty_cycle = jnp.linspace(0.0, 0.2, C, dtype=jnp.float32)

    out, boost_term = kwinner_forward(
        x, duty_cycle, k=K, boost=True, beta=1.0, k_inference_factor=1.0)
    out = jax.block_until_ready(out)

    ref = kwinner_reference(x, boost_term, int(K * 1.0))
    np.testing.assert_allclose(np.asarray(out), np.asarray(ref), rtol=0, atol=0)

    print("KERNEL_OK")
</pallas_src>

<mosaic_0001>
module attributes {stable_mosaic.version = 11 : i64} {
  func.func @_kwinner_kernel(%arg0: i32, %arg1: memref<2x1024xf32, #tpu.memory_space<vmem>>, %arg2: memref<1x1024xf32, #tpu.memory_space<vmem>>, %arg3: memref<2x1024xf32, #tpu.memory_space<vmem>>, %arg4: memref<2x1024xi32, #tpu.memory_space<vmem>>) attributes {dimension_semantics = [#tpu.dimension_semantics<parallel>], iteration_bounds = array<i64: 1>, scalar_prefetch = 0 : i64, scratch_operands = 1 : i64, tpu.core_type = #tpu.core_type<tc>, window_params = [{transform_indices = @transform_0, window_bounds = array<i64: 2, 1024>}, {pipeline_mode = #tpu.pipeline_mode<synchronous>, transform_indices = @transform_1, window_bounds = array<i64: 1, 1024>}, {transform_indices = @transform_2, window_bounds = array<i64: 2, 1024>}]} {
    %c0 = arith.constant 0 : index
    %c0_0 = arith.constant 0 : index
    %0 = vector.load %arg1[%c0, %c0_0] : memref<2x1024xf32, #tpu.memory_space<vmem>>, vector<2x1024xf32>
    %c0_1 = arith.constant 0 : index
    %c0_2 = arith.constant 0 : index
    %1 = vector.load %arg2[%c0_1, %c0_2] : memref<1x1024xf32, #tpu.memory_space<vmem>>, vector<1x1024xf32>
    %2 = vector.broadcast %1 : vector<1x1024xf32> to vector<2x1024xf32>
    %3 = arith.mulf %0, %2 : vector<2x1024xf32>
    %4 = tpu.bitcast %3 : vector<2x1024xf32> -> vector<2x1024xi32>
    %c0_i32 = arith.constant 0 : i32
    %5 = vector.broadcast %c0_i32 : i32 to vector<2x1024xi32>
    %6 = arith.cmpi slt, %4, %5 : vector<2x1024xi32>
    %c2147483647_i32 = arith.constant 2147483647 : i32
    %7 = vector.broadcast %c2147483647_i32 : i32 to vector<2x1024xi32>
    %8 = arith.xori %4, %7 : vector<2x1024xi32>
    %9 = arith.select %6, %8, %4 : vector<2x1024xi1>, vector<2x1024xi32>
    %c0_3 = arith.constant 0 : index
    %c0_4 = arith.constant 0 : index
    %10 = vector.load %arg4[%c0_3, %c0_4] : memref<2x1024xi32, #tpu.memory_space<vmem>>, vector<2x1024xi32>
    tpu.vector_store %arg4[%c0_3, %c0_4], %9 {strides = array<i32>} : memref<2x1024xi32, #tpu.memory_space<vmem>>, vector<2x1024xi32>,
    %c0_5 = arith.constant 0 : index
    %c0_6 = arith.constant 0 : index
    %11 = vector.load %arg4[%c0_5, %c0_6] : memref<2x1024xi32, #tpu.memory_space<vmem>>, vector<2x1024xi32>
    %c0_i32_7 = arith.constant 0 : i32
    %12 = vector.broadcast %c0_i32_7 : i32 to vector<2x1024xi32>
    %13 = arith.cmpi sge, %11, %12 : vector<2x1024xi32>
    %14 = arith.extui %13 : vector<2x1024xi1> to vector<2x1024xi32>
    %cst = arith.constant dense<0> : vector<2xi32>
    %15 = vector.multi_reduction <add>, %14, %cst [1] : vector<2x1024xi32> to vector<2xi32>
    %16 = vector.shape_cast %15 : vector<2xi32> to vector<2x1xi32>
    %c64_i32 = arith.constant 64 : i32
    %17 = vector.broadcast %c64_i32 : i32 to vector<2x1xi32>
    %18 = arith.cmpi sge, %16, %17 : vector<2x1xi32>
    %c0_i32_8 = arith.constant 0 : i32
    %c-2147483648_i32 = arith.constant -2147483648 : i32
    %19 = vector.broadcast %c0_i32_8 : i32 to vector<2x1xi32>
    %20 = vector.broadcast %c-2147483648_i32 : i32 to vector<2x1xi32>
    %21 = arith.select %18, %19, %20 : vector<2x1xi1>, vector<2x1xi32>
    %c1073741824_i32 = arith.constant 1073741824 : i32
    %c0_i32_9 = arith.constant 0 : i32
    %c31_i32 = arith.constant 31 : i32
    %22 = arith.addi %c0_i32_9, %c31_i32 : i32
    %c1_i32 = arith.constant 1 : i32
    %23:2 = scf.for %arg5 = %c0_i32_9 to %22 step %c1_i32 iter_args(%arg6 = %21, %arg7 = %c1073741824_i32) -> (vector<2x1xi32>, i32)  : i32 {
      %31 = vector.broadcast %arg7 : i32 to vector<2x1xi32>
      %32 = arith.addi %arg6, %31 : vector<2x1xi32>
      %c0_17 = arith.constant 0 : index
      %c0_18 = arith.constant 0 : index
      %33 = vector.load %arg4[%c0_17, %c0_18] : memref<2x1024xi32, #tpu.memory_space<vmem>>, vector<2x1024xi32>
      %34 = vector.broadcast %32 : vector<2x1xi32> to vector<2x1024xi32>
      %35 = arith.cmpi sge, %33, %34 : vector<2x1024xi32>
      %36 = arith.extui %35 : vector<2x1024xi1> to vector<2x1024xi32>
      %cst_19 = arith.constant dense<0> : vector<2xi32>
      %37 = vector.multi_reduction <add>, %36, %cst_19 [1] : vector<2x1024xi32> to vector<2xi32>
      %38 = vector.shape_cast %37 : vector<2xi32> to vector<2x1xi32>
      %c64_i32_20 = arith.constant 64 : i32
      %39 = vector.broadcast %c64_i32_20 : i32 to vector<2x1xi32>
      %40 = arith.cmpi sge, %38, %39 : vector<2x1xi32>
      %41 = arith.select %40, %32, %arg6 : vector<2x1xi1>, vector<2x1xi32>
      %c1_i32_21 = arith.constant 1 : i32
      %42 = arith.shrsi %arg7, %c1_i32_21 : i32
      scf.yield %41, %42 : vector<2x1xi32>, i32
    }
    %c0_10 = arith.constant 0 : index
    %c0_11 = arith.constant 0 : index
    %24 = vector.load %arg4[%c0_10, %c0_11] : memref<2x1024xi32, #tpu.memory_space<vmem>>, vector<2x1024xi32>
    %25 = vector.broadcast %23#0 : vector<2x1xi32> to vector<2x1024xi32>
    %26 = arith.cmpi sge, %24, %25 : vector<2x1024xi32>
    %c0_12 = arith.constant 0 : index
    %c0_13 = arith.constant 0 : index
    %27 = vector.load %arg1[%c0_12, %c0_13] : memref<2x1024xf32, #tpu.memory_space<vmem>>, vector<2x1024xf32>
    %cst_14 = arith.constant 0.000000e+00 : f32
    %28 = vector.broadcast %cst_14 : f32 to vector<2x1024xf32>
    %29 = arith.select %26, %27, %28 : vector<2x1024xi1>, vector<2x1024xf32>
    %c0_15 = arith.constant 0 : index
    %c0_16 = arith.constant 0 : index
    %30 = vector.load %arg3[%c0_15, %c0_16] : memref<2x1024xf32, #tpu.memory_space<vmem>>, vector<2x1024xf32>
    tpu.vector_store %arg3[%c0_15, %c0_16], %29 {strides = array<i32>} : memref<2x1024xf32, #tpu.memory_space<vmem>>, vector<2x1024xf32>,
    return
  }
  func.func @transform_0(%arg0: i32) -> (i32, i32) {
    %c0_i32 = arith.constant 0 : i32
    %c0_i32_0 = arith.constant 0 : i32
    return %arg0, %c0_i32 : i32, i32
  }
  func.func @transform_1(%arg0: i32) -> (i32, i32) {
    %c0_i32 = arith.constant 0 : i32
    %c0_i32_0 = arith.constant 0 : i32
    %c0_i32_1 = arith.constant 0 : i32
    return %c0_i32, %c0_i32_0 : i32, i32
  }
  func.func @transform_2(%arg0: i32) -> (i32, i32) {
    %c0_i32 = arith.constant 0 : i32
    %c0_i32_0 = arith.constant 0 : i32
    return %arg0, %c0_i32 : i32, i32
  }
}

</mosaic_0001>

<llo_original>
// kernel: tpu_custom_call.1
$region0: #{tpu_custom_call.1}
  #allocation0 [shape = 'u32[]', space=smem, size = 0x4, offset = 0x4, fixed_abs, tag = 'smem constant byte address 0x4 - core index']
  #allocation1 [shape = 'u32[72,128]{1,0:T(1,128)}', space=vmem, size = 0x9000, scoped, tag = 'internal scratch']
  #allocation2 [shape = 's32[2,1024]{1,0:T(2,128)}', space=vmem, size = 0x2000, scoped, tag = 'scratch operand']
  %s0 = inlined_call_operand.hbm [shape: f32[2,1024], index: 0, kind: input, shape index: {}]
  %s1 = inlined_call_operand.hbm [shape: f32[1,1024], index: 1, kind: input, shape index: {}]
  %s2 = inlined_call_operand.hbm [shape: f32[2,1024], index: 2, kind: output, shape index: {}]
  %s3 = sld [smem:[#allocation0]]
  $region33: #{tpu_custom_call.1} parent=0
    _
  %s5 = ssub.s32 1, %s3
  %s6 = scalar_select 0, %s5, %s3
  $region1: #{tpu_custom_call.1} parent=0
    #allocation3 [shape = 'u8[8192]{0}', space=vmem, size = 0x2000, scoped, tag = 'input window, operand 0, single buffered']
    #allocation4 [shape = 's32[1]{0}', space=sflag, size = 0x4, scoped, tag = 'scoped memory for tpu_custom_call.1']
    #allocation5 [shape = 's32[1]{0}', space=sflag, size = 0x4, scoped, tag = 'scoped memory for tpu_custom_call.1']
    #allocation6 [shape = 'u8[4096]{0}', space=vmem, size = 0x1000, scoped, tag = 'input window, operand 1, single buffered']
    #allocation7 [shape = 's32[1]{0}', space=sflag, size = 0x4, scoped, tag = 'scoped memory for tpu_custom_call.1']
    #allocation8 [shape = 'u8[8192]{0}', space=vmem, size = 0x2000, scoped, tag = 'output window, operand 0, single buffered']
    %7 = vsyncpa [#allocation4], 0
    %8 = vsyncpa [#allocation7], 0
    %9 = vsyncpa [#allocation5], 0
    // Predicated region
    $region2: #{tpu_custom_call.1} parent=1 // pred_check
      _
    $region3: #{tpu_custom_call.1} parent=1 // pred_check_branch
      %11 = sbr.rel (0) target = $region5
    $region4: #{tpu_custom_call.1} parent=1 // pred_region
      %13 = vsyncadd [#allocation4], 0
      %s15 = sshll.u32 %s0, 4
      %s16 = int_to_ptr.hbm [resolvable:$true] %s15
      %s17 = sshll.u32 [#allocation3], 4
      %s18 = int_to_ptr.vmem [resolvable:$true] %s17
      %20 = dma.hbm_to_vmem [thread:$0]  %s16, 256, %s18, [#allocation4]
    $region5: #{tpu_custom_call.1} parent=1 // pred_fallthru
      _
    // Predicated region
    $region6: #{tpu_custom_call.1} parent=1 // pred_check
      _
    $region7: #{tpu_custom_call.1} parent=1 // pred_check_branch
      %22 = sbr.rel (0) target = $region9
    $region8: #{tpu_custom_call.1} parent=1 // pred_region
      %24 = vsyncadd [#allocation7], 0
      %s26 = sshll.u32 %s1, 4
      %s27 = int_to_ptr.hbm [resolvable:$true] %s26
      %s28 = sshll.u32 [#allocation6], 4
      %s29 = int_to_ptr.vmem [resolvable:$true] %s28
      %31 = dma.hbm_to_vmem [thread:$0]  %s27, 128, %s29, [#allocation7]
    $region9: #{tpu_custom_call.1} parent=1 // pred_fallthru
      _
    // Predicated region
    $region10: #{tpu_custom_call.1} parent=1 // pred_check
      _
    $region11: #{tpu_custom_call.1} parent=1 // pred_check_branch
      %33 = sbr.rel (0) target = $region13
    $region12: #{tpu_custom_call.1} parent=1 // pred_region
      %35 = dma.done [#allocation4], 256
    $region13: #{tpu_custom_call.1} parent=1 // pred_fallthru
      _
    // Predicated region
    $region14: #{tpu_custom_call.1} parent=1 // pred_check
      _
    $region15: #{tpu_custom_call.1} parent=1 // pred_check_branch
      %37 = sbr.rel (0) target = $region17
    $region16: #{tpu_custom_call.1} parent=1 // pred_region
      %39 = dma.done [#allocation7], 128
    $region17: #{tpu_custom_call.1} parent=1 // pred_fallthru
      _
    %v40 = vld [vmem:[#allocation3] sm:$0xff]
    %v41 = vld [vmem:[#allocation3 + $0x8] sm:$0xff]
    %v42 = vld [vmem:[#allocation6] sm:$0xff]
    %v44 = vperm.slane %v42, 0
    %v45 = vperm.slane %v42, 1
    %v46 = vperm.slane %v42, 2
    %v47 = vperm.slane %v42, 3
    %v48 = vperm.slane %v42, 4
    %v49 = vperm.slane %v42, 5
    %v50 = vperm.slane %v42, 6
    %v51 = vperm.slane %v42, 7
    %v52 = vrot.slane %v45, 6
    %v53 = vrot.slane %v46, 4
    %v54 = vrot.slane %v47, 2
    %v55 = vrot.slane %v49, 6
    %v56 = vrot.slane %v50, 4
    %v57 = vrot.slane %v51, 2
    %vm58 = vcmask 1041408
    %v59 = vsel %vm58, %v44, %v52
    %vm60 = vcmask 1045508
    %v61 = vsel %vm60, %v53, %v54
    %vm62 = vcmask 1043456
    %v63 = vsel %vm62, %v59, %v61
    %v64 = vsel %vm58, %v48, %v55
    %v65 = vsel %vm60, %v56, %v57
    %v66 = vsel %vm62, %v64, %v65
    %v69 = vmul.f32 %v40, %v63
    %v70 = vmul.f32 %v41, %v66
    %73 = vst [vmem:[#allocation1] ss:$4 sm:$0xff] %v69
    %s74 = scalar_lea.vmem [#allocation1], 32
    %75 = vst [vmem:[%s74] ss:$4 sm:$0xff] %v70
    %v76 = vld.sshfl [vmem:[#allocation1] sm:$0xff pattern:$0x73625140]
    %v77 = vld.sshfl [vmem:[#allocation1 + $0x8] sm:$0xff pattern:$0x73625140]
    %v78 = vld.sshfl [vmem:[#allocation1 + $0x10] sm:$0xff pattern:$0x73625140]
    %v79 = vld.sshfl [vmem:[#allocation1 + $0x18] sm:$0xff pattern:$0x73625140]
    %v80 = vld.sshfl [vmem:[#allocation1 + $0x20] sm:$0xff pattern:$0x73625140]
    %v81 = vld.sshfl [vmem:[#allocation1 + $0x28] sm:$0xff pattern:$0x73625140]
    %v82 = vld.sshfl [vmem:[#allocation1 + $0x30] sm:$0xff pattern:$0x73625140]
    %v83 = vld.sshfl [vmem:[#allocation1 + $0x38] sm:$0xff pattern:$0x73625140]
    %vm84 = vcmp.lt.s32.totalorder %v76, 0
    %vm85 = vcmp.lt.s32.totalorder %v77, 0
    %vm86 = vcmp.lt.s32.totalorder %v78, 0
    %vm87 = vcmp.lt.s32.totalorder %v79, 0
    %vm88 = vcmp.lt.s32.totalorder %v80, 0
    %vm89 = vcmp.lt.s32.totalorder %v81, 0
    %vm90 = vcmp.lt.s32.totalorder %v82, 0
    %vm91 = vcmp.lt.s32.totalorder %v83, 0
    %v92 = vxor.u32 %v76, 2147483647
    %v93 = vxor.u32 %v77, 2147483647
    %v94 = vxor.u32 %v78, 2147483647
    %v95 = vxor.u32 %v79, 2147483647
    %v96 = vxor.u32 %v80, 2147483647
    %v97 = vxor.u32 %v81, 2147483647
    %v98 = vxor.u32 %v82, 2147483647
    %v99 = vxor.u32 %v83, 2147483647
    %v100 = vsel %vm84, %v92, %v76
    %v101 = vsel %vm85, %v93, %v77
    %v102 = vsel %vm86, %v94, %v78
    %v103 = vsel %vm87, %v95, %v79
    %v104 = vsel %vm88, %v96, %v80
    %v105 = vsel %vm89, %v97, %v81
    %v106 = vsel %vm90, %v98, %v82
    %v107 = vsel %vm91, %v99, %v83
    %v108 = vrot.slane %v101, 6
    %v109 = vrot.slane %v102, 4
    %v110 = vrot.slane %v103, 2
    %v111 = vrot.slane %v105, 6
    %v112 = vrot.slane %v106, 4
    %v113 = vrot.slane %v107, 2
    %v114 = vsel %vm58, %v100, %v108
    %v115 = vsel %vm60, %v109, %v110
    %v116 = vsel %vm62, %v114, %v115
    %v117 = vsel %vm58, %v104, %v111
    %v118 = vsel %vm60, %v112, %v113
    %v119 = vsel %vm62, %v117, %v118
    %120 = vst [vmem:[#allocation2] sm:$0xff] %v116
    %121 = vst [vmem:[#allocation2 + $0x8] sm:$0xff] %v119
    %v122 = vld [vmem:[#allocation2] sm:$0xff]
    %v123 = vld [vmem:[#allocation2 + $0x8] sm:$0xff]
    %vm124 = vcmp.ge.s32.totalorder %v122, 0
    %vm125 = vcmp.ge.s32.totalorder %v123, 0
    %v126 = vsel %vm124, 1, 0
    %v127 = vsel %vm125, 1, 0
    %128 = vst [vmem:[#allocation1] ss:$4 sm:$0xff] %v126
    %s129 = scalar_lea.vmem [#allocation1], 32
    %130 = vst [vmem:[%s129] ss:$4 sm:$0xff] %v127
    %v131 = vld.sshfl [vmem:[#allocation1] sm:$0xff pattern:$0x73625140]
    %v132 = vld.sshfl [vmem:[#allocation1 + $0x8] sm:$0xff pattern:$0x73625140]
    %v133 = vld.sshfl [vmem:[#allocation1 + $0x10] sm:$0xff pattern:$0x73625140]
    %v134 = vld.sshfl [vmem:[#allocation1 + $0x18] sm:$0xff pattern:$0x73625140]
    %v135 = vld.sshfl [vmem:[#allocation1 + $0x20] sm:$0xff pattern:$0x73625140]
    %v136 = vld.sshfl [vmem:[#allocation1 + $0x28] sm:$0xff pattern:$0x73625140]
    %v137 = vld.sshfl [vmem:[#allocation1 + $0x30] sm:$0xff pattern:$0x73625140]
    %v138 = vld.sshfl [vmem:[#allocation1 + $0x38] sm:$0xff pattern:$0x73625140]
    %v139 = vsel %vm58, %v131, 0
    %v140 = vsel %vm58, %v132, 0
    %v141 = vsel %vm58, %v133, 0
    %v142 = vsel %vm58, %v134, 0
    %v143 = vsel %vm58, %v135, 0
    %v144 = vadd.s32 %v139, %v143
    %v145 = vsel %vm58, %v136, 0
    %v146 = vadd.s32 %v140, %v145
    %v147 = vsel %vm58, %v137, 0
    %v148 = vadd.s32 %v141, %v147
    %v149 = vsel %vm58, %v138, 0
    %v150 = vadd.s32 %v142, %v149
    %v151 = vadd.s32 %v144, %v146
    %v152 = vadd.s32 %v148, %v150
    %v153 = vadd.s32 %v151, %v152
    %v154 = vand.u32 %v153, 65535
    %v155 = vshrl.u32 %v153, 16
    %v156 = vcvt.s32.f32 %v154
    %v157 = vcvt.s32.f32 %v155
    %158 = vadd.xlane.f32.xlu0 %v156
    %v159 = vpop.xlane.xlu0 %158
    %160 = vadd.xlane.f32.xlu0 %v157
    %v161 = vpop.xlane.xlu0 %160
    %v162 = vcvt.f32.s32 %v159
    %v163 = vcvt.f32.s32 %v161
    %v164 = vshll.u32 %v163, 16
    %v165 = vadd.s32 %v164, %v162
    %vm166 = vcmp.ge.s32.totalorder %v165, 64
    %v167 = vsel %vm166, 0, 2147483648
    loop: start=0, step=1, limit=31
    $region18: #{tpu_custom_call.1} parent=1 // loop_pre_header
      _
    $region19: #{tpu_custom_call.1} parent=1 // loop_header
      %s169 = sphi 0, %s173
      %p170 = scmp.ge.s32.totalorder %s169, 31
      %v174 = vphi %v167, %v227
      %s175 = sphi 1073741824, %s228
    $region20: #{tpu_custom_call.1} parent=1 // loop_header_branch
      %172 = sbr.rel (%p170) target = $region24
    $region21: #{tpu_custom_call.1} parent=1 // loop_body
      %v176 = vstv %s175
      %v177 = vadd.s32 %v174, %v176
      %v178 = vld [vmem:[#allocation2] sm:$0xff]
      %v179 = vld [vmem:[#allocation2 + $0x8] sm:$0xff]
      %v181 = vunpack.c.l.s4 269488144
      %v182 = vunpack.c.0.s8 %v181
      %v183 = vperm.slane %v177, %v182
      %vm184 = vcmp.ge.s32.totalorder %v178, %v183
      %vm185 = vcmp.ge.s32.totalorder %v179, %v183
      %v186 = vsel %vm184, 1, 0
      %v187 = vsel %vm185, 1, 0
      %188 = vst [vmem:[#allocation1] ss:$4 sm:$0xff] %v186
      %s189 = scalar_lea.vmem [#allocation1], 32
      %190 = vst [vmem:[%s189] ss:$4 sm:$0xff] %v187
      %v191 = vld.sshfl [vmem:[#allocation1] sm:$0xff pattern:$0x73625140]
      %v192 = vld.sshfl [vmem:[#allocation1 + $0x8] sm:$0xff pattern:$0x73625140]
      %v193 = vld.sshfl [vmem:[#allocation1 + $0x10] sm:$0xff pattern:$0x73625140]
      %v194 = vld.sshfl [vmem:[#allocation1 + $0x18] sm:$0xff pattern:$0x73625140]
      %v195 = vld.sshfl [vmem:[#allocation1 + $0x20] sm:$0xff pattern:$0x73625140]
      %v196 = vld.sshfl [vmem:[#allocation1 + $0x28] sm:$0xff pattern:$0x73625140]
      %v197 = vld.sshfl [vmem:[#allocation1 + $0x30] sm:$0xff pattern:$0x73625140]
      %v198 = vld.sshfl [vmem:[#allocation1 + $0x38] sm:$0xff pattern:$0x73625140]
      %v199 = vsel %vm58, %v191, 0
      %v200 = vsel %vm58, %v192, 0
      %v201 = vsel %vm58, %v193, 0
      %v202 = vsel %vm58, %v194, 0
      %v203 = vsel %vm58, %v195, 0
      %v204 = vadd.s32 %v199, %v203
      %v205 = vsel %vm58, %v196, 0
      %v206 = vadd.s32 %v200, %v205
      %v207 = vsel %vm58, %v197, 0
      %v208 = vadd.s32 %v201, %v207
      %v209 = vsel %vm58, %v198, 0
      %v210 = vadd.s32 %v202, %v209
      %v211 = vadd.s32 %v204, %v206
      %v212 = vadd.s32 %v208, %v210
      %v213 = vadd.s32 %v211, %v212
      %v214 = vand.u32 %v213, 65535
      %v215 = vshrl.u32 %v213, 16
      %v216 = vcvt.s32.f32 %v214
      %v217 = vcvt.s32.f32 %v215
      %218 = vadd.xlane.f32.xlu0 %v216
      %v219 = vpop.xlane.xlu0 %218
      %220 = vadd.xlane.f32.xlu0 %v217
      %v221 = vpop.xlane.xlu0 %220
      %v222 = vcvt.f32.s32 %v219
      %v223 = vcvt.f32.s32 %v221
      %v224 = vshll.u32 %v223, 16
      %v225 = vadd.s32 %v224, %v222
      %vm226 = vcmp.ge.s32.totalorder %v225, 64
      %v227 = vsel %vm226, %v177, %v174
      %s228 = sshra.s32 %s175, 1
    $region22: #{tpu_custom_call.1} parent=1 // loop_footer
      %s173 = sadd.s32 1, %s169
    $region23: #{tpu_custom_call.1} parent=1 // loop_footer_branch
      %168 = sbr.rel target = $region19
    $region24: #{tpu_custom_call.1} parent=1 // loop_exit
      _
    %v230 = vunpack.c.l.s4 269488144
    %v231 = vunpack.c.0.s8 %v230
    %v232 = vperm.slane %v174, %v231
    %vm233 = vcmp.ge.s32.totalorder %v122, %v232
    %vm234 = vcmp.ge.s32.totalorder %v123, %v232
    %v235 = vld [vmem:[#allocation3] sm:$0xff]
    %v236 = vld [vmem:[#allocation3 + $0x8] sm:$0xff]
    %v237 = vsel %vm233, %v235, 0.0
    %v238 = vsel %vm234, %v236, 0.0
    %239 = vst [vmem:[#allocation8] sm:$0xff] %v237
    %240 = vst [vmem:[#allocation8 + $0x8] sm:$0xff] %v238
    // Predicated region
    $region25: #{tpu_custom_call.1} parent=1 // pred_check
      _
    $region26: #{tpu_custom_call.1} parent=1 // pred_check_branch
      %242 = sbr.rel (0) target = $region28
    $region27: #{tpu_custom_call.1} parent=1 // pred_region
      %244 = vsyncadd [#allocation5], 0
      %s246 = sshll.u32 [#allocation8], 4
      %s247 = int_to_ptr.vmem [resolvable:$true] %s246
      %s248 = sshll.u32 %s2, 4
      %s249 = int_to_ptr.hbm [resolvable:$true] %s248
      %251 = dma.vmem_to_hbm [thread:$0]  %s247, 256, %s249, [#allocation5]
    $region28: #{tpu_custom_call.1} parent=1 // pred_fallthru
      _
    // Predicated region
    $region29: #{tpu_custom_call.1} parent=1 // pred_check
      _
    $region30: #{tpu_custom_call.1} parent=1 // pred_check_branch
      %253 = sbr.rel (0) target = $region32
    $region31: #{tpu_custom_call.1} parent=1 // pred_region
      %255 = dma.done [#allocation5], 256
    $region32: #{tpu_custom_call.1} parent=1 // pred_fallthru
      _
    %256 = vsyncpa [#allocation4], 1
    %257 = vsyncpa [#allocation7], 1
    %258 = vsyncpa [#allocation5], 1

</llo_original>
